<compile_context>
chip_gen: v6e
topology: v6e:2x2x1
jax: 0.10.0
libtpu: 0.0.40
codegen_flags: <defaults>
</compile_context>

<pallas_src>
import jax
import jax.numpy as jnp
from jax.experimental import pallas as pl
from jax.experimental.pallas import tpu as pltpu


def _gunpool_gather_kernel(inv_ref, xl_ref, out_ref):
    """Gather TM destination rows per grid step.

    inv_ref : SMEM int32[padded n_big]  inverse map (sentinel = n_small)
    xl_ref  : VMEM (n_small, C)         whole source, DMA'd once
    out_ref : VMEM (TM, C)              output tile for this grid step
    """
    i = pl.program_id(0)
    tm, c = out_ref.shape
    n_small = xl_ref.shape[0]
    base = i * tm
    zero_row = jnp.zeros((1, c), dtype=out_ref.dtype)  # hoisted out of the loop
    # Static unroll (TM is small): store index is static and sequential,
    # only the gather load uses a dynamic sublane offset.
    for r in range(tm):
        j = inv_ref[base + r]                  # SMEM scalar read
        j_safe = jnp.minimum(j, n_small - 1)   # keep the dynamic load in-bounds
        row = xl_ref[pl.ds(j_safe, 1), :]      # dynamic (1, C) row gather
        out_ref[pl.ds(r, 1), :] = jnp.where(j < n_small, row, zero_row)


def g_unpool(xl, idxs, up_shape, *, tm=8):
    """Pallas equivalent of GUnpool.forward(xl, idxs, up_shape)."""
    n_big = int(up_shape[0])
    n_small, c = xl.shape
    out_dtype = xl.dtype

    if n_small == 0 or n_big == 0:
        return jnp.zeros((n_big, c), dtype=out_dtype)

    idxs = idxs.astype(jnp.int32)
    # PyTorch-style negative index wrap; out-of-range clamped (see TODO above).
    idxs = jnp.where(idxs < 0, idxs + n_big, idxs)
    idxs = jnp.clip(idxs, 0, n_big - 1)

    # Inverse map: inv[d] = source row written to destination d, or the
    # sentinel n_small for destinations nobody writes (those stay zero).
    # Note: with duplicate idxs the surviving write is implementation-defined
    # (PyTorch is effectively last-write); normal unpool indices are unique.
    inv = jnp.full((n_big,), n_small, dtype=jnp.int32)
    inv = inv.at[idxs].set(jnp.arange(n_small, dtype=jnp.int32))

    # Tile the output rows.  tm small => the static unroll in the kernel stays
    # compact; raise to 16/32 (or switch to fori_loop) for large n_big.
    tm = min(tm, n_big)
    n_tiles = pl.cdiv(n_big, tm)
    pad = n_tiles * tm - n_big
    if pad:
        # Pad inv so SMEM reads for the (masked) edge tile never go OOB.
        inv = jnp.concatenate(
            [inv, jnp.full((pad,), n_small, dtype=jnp.int32)])

    itemsize = jnp.dtype(out_dtype).itemsize
    cost = pl.CostEstimate(
        flops=0,
        transcendentals=0,
        bytes_accessed=(n_small * c + n_big * c) * itemsize + inv.size * 4,
    )

    grid_spec = pltpu.PrefetchScalarGridSpec(
        num_scalar_prefetch=1,                 # inv -> SMEM
        grid=(n_tiles,),
        in_specs=[
            # Whole xl, constant index_map -> single HBM->VMEM DMA, reused.
            pl.BlockSpec((n_small, c), lambda i, inv_ref: (0, 0)),
        ],
        out_specs=pl.BlockSpec((tm, c), lambda i, inv_ref: (i, 0)),
    )

    out = pl.pallas_call(
        _gunpool_gather_kernel,
        out_shape=jax.ShapeDtypeStruct((n_big, c), out_dtype),
        grid_spec=grid_spec,
        cost_estimate=cost,
        compiler_params=pltpu.CompilerParams(
            dimension_semantics=("parallel",)),   # disjoint output tiles
    )(inv, xl)

    return out


if __name__ == "__main__":
    key = jax.random.PRNGKey(0)
    k1, k2 = jax.random.split(key)

    n_small, c = 8, 32      # xl: (8, 32)
    n_big = 16              # up_shape[0] = 16

    xl = jax.random.normal(k1, (n_small, c), dtype=jnp.float32)
    # unique scatter indices (as an unpooling index set would be)
    idxs = jax.random.permutation(k2, n_big)[:n_small].astype(jnp.int32)
    up_shape = (n_big, c)

    out = jax.jit(g_unpool, static_argnums=2)(xl, idxs, up_shape)
    out = jax.block_until_ready(out)

    # reference: zeros + row scatter (matches the PyTorch forward)
    ref = jnp.zeros((n_big, c), dtype=xl.dtype).at[idxs].set(xl)

    assert out.shape == (n_big, c)
    assert jnp.allclose(out, ref, atol=1e-6), "mismatch vs reference scatter"
    print("KERNEL_OK")
</pallas_src>

<mosaic_0001>
module attributes {stable_mosaic.version = 11 : i64} {
  func.func @_gunpool_gather_kernel(%arg0: i32, %arg1: memref<16xi32, #tpu.memory_space<smem>>, %arg2: memref<8x32xf32, #tpu.memory_space<vmem>>, %arg3: memref<8x32xf32, #tpu.memory_space<vmem>>) attributes {dimension_semantics = [#tpu.dimension_semantics<parallel>], iteration_bounds = array<i64: 2>, scalar_prefetch = 1 : i64, scratch_operands = 0 : i64, tpu.core_type = #tpu.core_type<tc>, window_params = [{pipeline_mode = #tpu.pipeline_mode<synchronous>, transform_indices = @transform_0, window_bounds = array<i64: 8, 32>}, {transform_indices = @transform_1, window_bounds = array<i64: 8, 32>}]} {
    %c8_i32 = arith.constant 8 : i32
    %0 = arith.muli %arg0, %c8_i32 : i32
    %cst = arith.constant 0.000000e+00 : f32
    %1 = vector.broadcast %cst : f32 to vector<1x32xf32>
    %c0_i32 = arith.constant 0 : i32
    %2 = arith.addi %0, %c0_i32 : i32
    %3 = arith.index_cast %2 : i32 to index
    %4 = memref.load %arg1[%3] : memref<16xi32, #tpu.memory_space<smem>>
    %c7_i32 = arith.constant 7 : i32
    %5 = arith.minsi %4, %c7_i32 : i32
    %6 = arith.index_cast %5 : i32 to index
    %c0 = arith.constant 0 : index
    %7 = vector.load %arg2[%6, %c0] : memref<8x32xf32, #tpu.memory_space<vmem>>, vector<1x32xf32>
    %c8_i32_0 = arith.constant 8 : i32
    %8 = arith.cmpi slt, %4, %c8_i32_0 : i32
    %9 = arith.select %8, %7, %1 : vector<1x32xf32>
    %c0_1 = arith.constant 0 : index
    %c0_2 = arith.constant 0 : index
    %10 = vector.load %arg3[%c0_1, %c0_2] : memref<8x32xf32, #tpu.memory_space<vmem>>, vector<1x32xf32>
    tpu.vector_store %arg3[%c0_1, %c0_2], %9 {strides = array<i32>} : memref<8x32xf32, #tpu.memory_space<vmem>>, vector<1x32xf32>,
    %c1_i32 = arith.constant 1 : i32
    %11 = arith.addi %0, %c1_i32 : i32
    %12 = arith.index_cast %11 : i32 to index
    %13 = memref.load %arg1[%12] : memref<16xi32, #tpu.memory_space<smem>>
    %c7_i32_3 = arith.constant 7 : i32
    %14 = arith.minsi %13, %c7_i32_3 : i32
    %15 = arith.index_cast %14 : i32 to index
    %c0_4 = arith.constant 0 : index
    %16 = vector.load %arg2[%15, %c0_4] : memref<8x32xf32, #tpu.memory_space<vmem>>, vector<1x32xf32>
    %c8_i32_5 = arith.constant 8 : i32
    %17 = arith.cmpi slt, %13, %c8_i32_5 : i32
    %18 = arith.select %17, %16, %1 : vector<1x32xf32>
    %c1 = arith.constant 1 : index
    %c0_6 = arith.constant 0 : index
    %19 = vector.load %arg3[%c1, %c0_6] : memref<8x32xf32, #tpu.memory_space<vmem>>, vector<1x32xf32>
    tpu.vector_store %arg3[%c1, %c0_6], %18 {strides = array<i32>} : memref<8x32xf32, #tpu.memory_space<vmem>>, vector<1x32xf32>,
    %c2_i32 = arith.constant 2 : i32
    %20 = arith.addi %0, %c2_i32 : i32
    %21 = arith.index_cast %20 : i32 to index
    %22 = memref.load %arg1[%21] : memref<16xi32, #tpu.memory_space<smem>>
    %c7_i32_7 = arith.constant 7 : i32
    %23 = arith.minsi %22, %c7_i32_7 : i32
    %24 = arith.index_cast %23 : i32 to index
    %c0_8 = arith.constant 0 : index
    %25 = vector.load %arg2[%24, %c0_8] : memref<8x32xf32, #tpu.memory_space<vmem>>, vector<1x32xf32>
    %c8_i32_9 = arith.constant 8 : i32
    %26 = arith.cmpi slt, %22, %c8_i32_9 : i32
    %27 = arith.select %26, %25, %1 : vector<1x32xf32>
    %c2 = arith.constant 2 : index
    %c0_10 = arith.constant 0 : index
    %28 = vector.load %arg3[%c2, %c0_10] : memref<8x32xf32, #tpu.memory_space<vmem>>, vector<1x32xf32>
    tpu.vector_store %arg3[%c2, %c0_10], %27 {strides = array<i32>} : memref<8x32xf32, #tpu.memory_space<vmem>>, vector<1x32xf32>,
    %c3_i32 = arith.constant 3 : i32
    %29 = arith.addi %0, %c3_i32 : i32
    %30 = arith.index_cast %29 : i32 to index
    %31 = memref.load %arg1[%30] : memref<16xi32, #tpu.memory_space<smem>>
    %c7_i32_11 = arith.constant 7 : i32
    %32 = arith.minsi %31, %c7_i32_11 : i32
    %33 = arith.index_cast %32 : i32 to index
    %c0_12 = arith.constant 0 : index
    %34 = vector.load %arg2[%33, %c0_12] : memref<8x32xf32, #tpu.memory_space<vmem>>, vector<1x32xf32>
    %c8_i32_13 = arith.constant 8 : i32
    %35 = arith.cmpi slt, %31, %c8_i32_13 : i32
    %36 = arith.select %35, %34, %1 : vector<1x32xf32>
    %c3 = arith.constant 3 : index
    %c0_14 = arith.constant 0 : index
    %37 = vector.load %arg3[%c3, %c0_14] : memref<8x32xf32, #tpu.memory_space<vmem>>, vector<1x32xf32>
    tpu.vector_store %arg3[%c3, %c0_14], %36 {strides = array<i32>} : memref<8x32xf32, #tpu.memory_space<vmem>>, vector<1x32xf32>,
    %c4_i32 = arith.constant 4 : i32
    %38 = arith.addi %0, %c4_i32 : i32
    %39 = arith.index_cast %38 : i32 to index
    %40 = memref.load %arg1[%39] : memref<16xi32, #tpu.memory_space<smem>>
    %c7_i32_15 = arith.constant 7 : i32
    %41 = arith.minsi %40, %c7_i32_15 : i32
    %42 = arith.index_cast %41 : i32 to index
    %c0_16 = arith.constant 0 : index
    %43 = vector.load %arg2[%42, %c0_16] : memref<8x32xf32, #tpu.memory_space<vmem>>, vector<1x32xf32>
    %c8_i32_17 = arith.constant 8 : i32
    %44 = arith.cmpi slt, %40, %c8_i32_17 : i32
    %45 = arith.select %44, %43, %1 : vector<1x32xf32>
    %c4 = arith.constant 4 : index
    %c0_18 = arith.constant 0 : index
    %46 = vector.load %arg3[%c4, %c0_18] : memref<8x32xf32, #tpu.memory_space<vmem>>, vector<1x32xf32>
    tpu.vector_store %arg3[%c4, %c0_18], %45 {strides = array<i32>} : memref<8x32xf32, #tpu.memory_space<vmem>>, vector<1x32xf32>,
    %c5_i32 = arith.constant 5 : i32
    %47 = arith.addi %0, %c5_i32 : i32
    %48 = arith.index_cast %47 : i32 to index
    %49 = memref.load %arg1[%48] : memref<16xi32, #tpu.memory_space<smem>>
    %c7_i32_19 = arith.constant 7 : i32
    %50 = arith.minsi %49, %c7_i32_19 : i32
    %51 = arith.index_cast %50 : i32 to index
    %c0_20 = arith.constant 0 : index
    %52 = vector.load %arg2[%51, %c0_20] : memref<8x32xf32, #tpu.memory_space<vmem>>, vector<1x32xf32>
    %c8_i32_21 = arith.constant 8 : i32
    %53 = arith.cmpi slt, %49, %c8_i32_21 : i32
    %54 = arith.select %53, %52, %1 : vector<1x32xf32>
    %c5 = arith.constant 5 : index
    %c0_22 = arith.constant 0 : index
    %55 = vector.load %arg3[%c5, %c0_22] : memref<8x32xf32, #tpu.memory_space<vmem>>, vector<1x32xf32>
    tpu.vector_store %arg3[%c5, %c0_22], %54 {strides = array<i32>} : memref<8x32xf32, #tpu.memory_space<vmem>>, vector<1x32xf32>,
    %c6_i32 = arith.constant 6 : i32
    %56 = arith.addi %0, %c6_i32 : i32
    %57 = arith.index_cast %56 : i32 to index
    %58 = memref.load %arg1[%57] : memref<16xi32, #tpu.memory_space<smem>>
    %c7_i32_23 = arith.constant 7 : i32
    %59 = arith.minsi %58, %c7_i32_23 : i32
    %60 = arith.index_cast %59 : i32 to index
    %c0_24 = arith.constant 0 : index
    %61 = vector.load %arg2[%60, %c0_24] : memref<8x32xf32, #tpu.memory_space<vmem>>, vector<1x32xf32>
    %c8_i32_25 = arith.constant 8 : i32
    %62 = arith.cmpi slt, %58, %c8_i32_25 : i32
    %63 = arith.select %62, %61, %1 : vector<1x32xf32>
    %c6 = arith.constant 6 : index
    %c0_26 = arith.constant 0 : index
    %64 = vector.load %arg3[%c6, %c0_26] : memref<8x32xf32, #tpu.memory_space<vmem>>, vector<1x32xf32>
    tpu.vector_store %arg3[%c6, %c0_26], %63 {strides = array<i32>} : memref<8x32xf32, #tpu.memory_space<vmem>>, vector<1x32xf32>,
    %c7_i32_27 = arith.constant 7 : i32
    %65 = arith.addi %0, %c7_i32_27 : i32
    %66 = arith.index_cast %65 : i32 to index
    %67 = memref.load %arg1[%66] : memref<16xi32, #tpu.memory_space<smem>>
    %c7_i32_28 = arith.constant 7 : i32
    %68 = arith.minsi %67, %c7_i32_28 : i32
    %69 = arith.index_cast %68 : i32 to index
    %c0_29 = arith.constant 0 : index
    %70 = vector.load %arg2[%69, %c0_29] : memref<8x32xf32, #tpu.memory_space<vmem>>, vector<1x32xf32>
    %c8_i32_30 = arith.constant 8 : i32
    %71 = arith.cmpi slt, %67, %c8_i32_30 : i32
    %72 = arith.select %71, %70, %1 : vector<1x32xf32>
    %c7 = arith.constant 7 : index
    %c0_31 = arith.constant 0 : index
    %73 = vector.load %arg3[%c7, %c0_31] : memref<8x32xf32, #tpu.memory_space<vmem>>, vector<1x32xf32>
    tpu.vector_store %arg3[%c7, %c0_31], %72 {strides = array<i32>} : memref<8x32xf32, #tpu.memory_space<vmem>>, vector<1x32xf32>,
    return
  }
  func.func @transform_0(%arg0: i32, %arg1: memref<16xi32, #tpu.memory_space<smem>>) -> (i32, i32) {
    %c0_i32 = arith.constant 0 : i32
    %c0_i32_0 = arith.constant 0 : i32
    %c0_i32_1 = arith.constant 0 : i32
    return %c0_i32, %c0_i32_0 : i32, i32
  }
  func.func @transform_1(%arg0: i32, %arg1: memref<16xi32, #tpu.memory_space<smem>>) -> (i32, i32) {
    %c0_i32 = arith.constant 0 : i32
    %c0_i32_0 = arith.constant 0 : i32
    return %arg0, %c0_i32 : i32, i32
  }
}

</mosaic_0001>

<llo_original>
// kernel: g_unpool.1
$region0: #{g_unpool.1}
  #allocation0 [shape = 'u32[]', space=smem, size = 0x4, offset = 0x4, fixed_abs, tag = 'smem constant byte address 0x4 - core index']
  #allocation1 [shape = 'u32[144,128]{1,0:T(1,128)}', space=vmem, size = 0x12000, scoped, tag = 'internal scratch']
  #allocation2 [shape = 's32[1]{0}', space=sflag, size = 0x4, scoped, tag = 'scoped memory for g_unpool.1']
  #allocation3 [shape = 'u8[512]{0}', space=smem, size = 0x200, scoped, tag = 'prefetched SMEM operand 0']
  %s0 = inlined_call_operand.vmem [shape: s32[16], index: 0, kind: input, shape index: {}]
  %s1 = inlined_call_operand.hbm [shape: f32[8,32], index: 1, kind: input, shape index: {}]
  %s2 = inlined_call_operand.hbm [shape: f32[16,32], index: 2, kind: output, shape index: {}]
  %s3 = sld [smem:[#allocation0]]
  $region41: #{g_unpool.1} parent=0
    _
  %s5 = ssub.s32 1, %s3
  %s6 = scalar_select 0, %s5, %s3
  %s7 = sshll.u32 %s0, 4
  %s8 = int_to_ptr.vmem [resolvable:$true] %s7
  %10 = dma.vmem_to_smem %s8, 16, [#allocation3], [#allocation2]
  %11 = dma.done [#allocation2], 16
  %12 = sfence
  $region1: #{g_unpool.1} parent=0
    #allocation4 [shape = 'u8[4096]{0}', space=vmem, size = 0x1000, scoped, tag = 'input window, operand 1, single buffered']
    #allocation5 [shape = 's32[2]{0}', space=sflag, size = 0x8, scoped, tag = 'scoped memory for g_unpool.1']
    #allocation6 [shape = 's32[2]{0}', space=sflag, size = 0x8, scoped, tag = 'scoped memory for g_unpool.1']
    #allocation7 [shape = 'u8[8192]{0}', space=vmem, size = 0x2000, scoped, tag = 'output window, operand 0']
    %13 = vsyncpa [#allocation5], 0
    %14 = vsyncpa [#allocation6], 0
    %s15 = scalar_lea.sflag [#allocation6], 1
    %16 = vsyncpa %s15, 0
    loop: start=0, step=1, limit=4
    $region2: #{g_unpool.1} parent=1 // loop_pre_header
      _
    $region3: #{g_unpool.1} parent=1 // loop_header
      %s18 = sphi 0, %s22
      %p19 = scmp.ge.s32.totalorder %s18, 4
      %s26 = sphi 0, %s26
      %s28 = sphi 0, %s26
      %s29 = sphi 0, %s28
      %s43 = sphi 0, %s29
      %s49 = sphi 0, %s51
      %s52 = sphi 0, %s49
      %s53 = sphi 0, %s52
      %s69 = sphi 0, %s53
    $region4: #{g_unpool.1} parent=1 // loop_header_branch
      %21 = sbr.rel (%p19) target = $region8
    $region5: #{g_unpool.1} parent=1 // loop_body
      %s23 = ssub.s32 %s18, 1
      %s24 = ssub.s32 %s18, 2
      %s25 = sadd.s32 %s18, 1
      %s27 = sadd.s32 %s26, 1
      %p30 = scmp.eq.s32.totalorder %s18, 1
      %p31 = scmp.ne.s32.totalorder %s26, %s28
      %p32 = scmp.eq.s32.totalorder %s18, 0
      %p33 = por %p31, %p32
      %p34 = scmp.ne.s32.totalorder %s26, %s28
      %p35 = scmp.eq.s32.totalorder %s23, 1
      %p36 = por %p34, %p35
      %p37 = scmp.ne.s32.totalorder %s28, %s29
      %p38 = scmp.eq.s32.totalorder %s23, 0
      %p39 = por %p37, %p38
      %p40 = scmp.ne.s32.totalorder %s28, %s29
      %p41 = scmp.eq.s32.totalorder %s24, 1
      %p42 = por %p40, %p41
      %p44 = scmp.ne.s32.totalorder %s29, %s43
      %p45 = scmp.eq.s32.totalorder %s24, 0
      %p46 = por %p44, %p45
      %s47 = ssub.s32 %s18, %s25
      %p48 = scmp.eq.s32.totalorder %s47, 0
      %s50 = sadd.s32 %s49, 1
      %s51 = scalar_select %p48, %s49, %s50
      %p54 = pneg %p48
      %p55 = scmp.eq.s32.totalorder %s18, 1
      %p56 = por %p54, %p55
      %p57 = scmp.ne.s32.totalorder %s49, %s52
      %p58 = scmp.eq.s32.totalorder %s18, 0
      %p59 = por %p57, %p58
      %p60 = scmp.ne.s32.totalorder %s49, %s52
      %p61 = scmp.eq.s32.totalorder %s23, 1
      %p62 = por %p60, %p61
      %p63 = scmp.ne.s32.totalorder %s52, %s53
      %p64 = scmp.eq.s32.totalorder %s23, 0
      %p65 = por %p63, %p64
      %p66 = scmp.ne.s32.totalorder %s52, %s53
      %p67 = scmp.eq.s32.totalorder %s24, 1
      %p68 = por %p66, %p67
      %p70 = scmp.ne.s32.totalorder %s53, %s69
      %p71 = scmp.eq.s32.totalorder %s24, 0
      %p72 = por %p70, %p71
      %p73 = scmp.le.s32.totalorder 1, %s18
      %p74 = scmp.lt.s32.totalorder %s18, 3
      %p75 = pnand %p73, %p74
      %p76 = pneg %p75
      // Predicated region
      $region9: #{g_unpool.1} parent=5 // pred_check
        _
      $region10: #{g_unpool.1} parent=5 // pred_check_branch
        %78 = sbr.rel (%p75) target = $region12
      $region11: #{g_unpool.1} parent=5 // pred_region
        %s79 = ssub.s32 %s18, 1
        // Predicated region
        $region13: #{g_unpool.1} parent=11 // pred_check
          %p80 = pneg %p39
        $region14: #{g_unpool.1} parent=11 // pred_check_branch
          %82 = sbr.rel (%p80) target = $region16
        $region15: #{g_unpool.1} parent=11 // pred_region
          %s84 = ssub.s32 128, 128
          %85 = vsyncadd [#allocation5], %s84
          %s87 = sshll.u32 [#allocation4], 4
          %s88 = int_to_ptr.vmem [resolvable:$true] %s87
          %90 = dma.hbm_to_vmem [thread:$0]  %s1, 128, %s88, [#allocation5]
        $region16: #{g_unpool.1} parent=11 // pred_fallthru
          _
      $region12: #{g_unpool.1} parent=5 // pred_fallthru
        _
      %p91 = scmp.lt.s32.totalorder %s18, 2
      // Predicated region
      $region17: #{g_unpool.1} parent=5 // pred_check
        %p92 = pneg %p91
      $region18: #{g_unpool.1} parent=5 // pred_check_branch
        %94 = sbr.rel (%p92) target = $region20
      $region19: #{g_unpool.1} parent=5 // pred_region
        _
      $region20: #{g_unpool.1} parent=5 // pred_fallthru
        _
      %p95 = scmp.le.s32.totalorder 1, %s18
      %p96 = scmp.lt.s32.totalorder %s18, 3
      %p97 = pnand %p95, %p96
      %p98 = pneg %p97
      // Predicated region
      $region21: #{g_unpool.1} parent=5 // pred_check
        _
      $region22: #{g_unpool.1} parent=5 // pred_check_branch
        %100 = sbr.rel (%p97) target = $region24
      $region23: #{g_unpool.1} parent=5 // pred_region
        %s101 = ssub.s32 %s18, 1
        // Predicated region
        $region25: #{g_unpool.1} parent=23 // pred_check
          %p102 = pneg %p39
        $region26: #{g_unpool.1} parent=23 // pred_check_branch
          %104 = sbr.rel (%p102) target = $region28
        $region27: #{g_unpool.1} parent=23 // pred_region
          %105 = dma.done [#allocation5], 128
        $region28: #{g_unpool.1} parent=23 // pred_fallthru
          _
        %p106 = pneg %p39
        %p107 = pneg %p36
        %p108 = pneg %p65
        %p109 = pneg %p62
        %s110 = sand.u32 %s52, 1
        %s111 = scalar_lea.sflag [#allocation6], %s110
        %s112 = sand.u32 %s52, 1
        %s113 = smul.addr %s112, 8
        %s114 = scalar_lea.vmem [#allocation7], %s113
        %s115 = smul.u32 %s23, 8
        %s116 = sld [smem:[#allocation3 + %s115]]
        %p117 = scmp.lt.s32.totalorder %s116, 7
        %s118 = scalar_select %p117, %s116, 7
        %s119 = scalar_lea.vmem [#allocation4], %s118
        %v120 = vld [vmem:[%s119] sm:$0x1]
        %p121 = scmp.lt.s32.totalorder %s116, 8
        %s122 = scalar_select %p121, 1, 0
        %v123 = vstv %s122
        %vm124 = vcmp.eq.s32.totalorder %v123, 1
        %v125 = vsel %vm124, %v120, 0.0
        %vm126 = vcmask 253952
        %127 = vst.msk [vmem:[%s114] sm:$0x1] %vm126, %v125
        %s128 = sadd.s32 %s115, 1
        %s129 = sld [smem:[#allocation3 + %s128]]
        %p130 = scmp.lt.s32.totalorder %s129, 7
        %s131 = scalar_select %p130, %s129, 7
        %s132 = scalar_lea.vmem [#allocation4], %s131
        %v133 = vld [vmem:[%s132] sm:$0x1]
        %p134 = scmp.lt.s32.totalorder %s129, 8
        %s135 = scalar_select %p134, 1, 0
        %v136 = vstv %s135
        %vm137 = vcmp.eq.s32.totalorder %v136, 1
        %v138 = vsel %vm137, %v133, 0.0
        %139 = vst.msk [vmem:[%s114 + $0x1] sm:$0x1] %vm126, %v138
        %s140 = sadd.s32 %s115, 2
        %s141 = sld [smem:[#allocation3 + %s140]]
        %p142 = scmp.lt.s32.totalorder %s141, 7
        %s143 = scalar_select %p142, %s141, 7
        %s144 = scalar_lea.vmem [#allocation4], %s143
        %v145 = vld [vmem:[%s144] sm:$0x1]
        %p146 = scmp.lt.s32.totalorder %s141, 8
        %s147 = scalar_select %p146, 1, 0
        %v148 = vstv %s147
        %vm149 = vcmp.eq.s32.totalorder %v148, 1
        %v150 = vsel %vm149, %v145, 0.0
        %151 = vst.msk [vmem:[%s114 + $0x2] sm:$0x1] %vm126, %v150
        %s152 = sadd.s32 %s115, 3
        %s153 = sld [smem:[#allocation3 + %s152]]
        %p154 = scmp.lt.s32.totalorder %s153, 7
        %s155 = scalar_select %p154, %s153, 7
        %s156 = scalar_lea.vmem [#allocation4], %s155
        %v157 = vld [vmem:[%s156] sm:$0x1]
        %p158 = scmp.lt.s32.totalorder %s153, 8
        %s159 = scalar_select %p158, 1, 0
        %v160 = vstv %s159
        %vm161 = vcmp.eq.s32.totalorder %v160, 1
        %v162 = vsel %vm161, %v157, 0.0
        %163 = vst.msk [vmem:[%s114 + $0x3] sm:$0x1] %vm126, %v162
        %s164 = sadd.s32 %s115, 4
        %s165 = sld [smem:[#allocation3 + %s164]]
        %p166 = scmp.lt.s32.totalorder %s165, 7
        %s167 = scalar_select %p166, %s165, 7
        %s168 = scalar_lea.vmem [#allocation4], %s167
        %v169 = vld [vmem:[%s168] sm:$0x1]
        %p170 = scmp.lt.s32.totalorder %s165, 8
        %s171 = scalar_select %p170, 1, 0
        %v172 = vstv %s171
        %vm173 = vcmp.eq.s32.totalorder %v172, 1
        %v174 = vsel %vm173, %v169, 0.0
        %175 = vst.msk [vmem:[%s114 + $0x4] sm:$0x1] %vm126, %v174
        %s176 = sadd.s32 %s115, 5
        %s177 = sld [smem:[#allocation3 + %s176]]
        %p178 = scmp.lt.s32.totalorder %s177, 7
        %s179 = scalar_select %p178, %s177, 7
        %s180 = scalar_lea.vmem [#allocation4], %s179
        %v181 = vld [vmem:[%s180] sm:$0x1]
        %p182 = scmp.lt.s32.totalorder %s177, 8
        %s183 = scalar_select %p182, 1, 0
        %v184 = vstv %s183
        %vm185 = vcmp.eq.s32.totalorder %v184, 1
        %v186 = vsel %vm185, %v181, 0.0
        %187 = vst.msk [vmem:[%s114 + $0x5] sm:$0x1] %vm126, %v186
        %s188 = sadd.s32 %s115, 6
        %s189 = sld [smem:[#allocation3 + %s188]]
        %p190 = scmp.lt.s32.totalorder %s189, 7
        %s191 = scalar_select %p190, %s189, 7
        %s192 = scalar_lea.vmem [#allocation4], %s191
        %v193 = vld [vmem:[%s192] sm:$0x1]
        %p194 = scmp.lt.s32.totalorder %s189, 8
        %s195 = scalar_select %p194, 1, 0
        %v196 = vstv %s195
        %vm197 = vcmp.eq.s32.totalorder %v196, 1
        %v198 = vsel %vm197, %v193, 0.0
        %199 = vst.msk [vmem:[%s114 + $0x6] sm:$0x1] %vm126, %v198
        %s200 = sadd.s32 %s115, 7
        %s201 = sld [smem:[#allocation3 + %s200]]
        %p202 = scmp.lt.s32.totalorder %s201, 7
        %s203 = scalar_select %p202, %s201, 7
        %s204 = scalar_lea.vmem [#allocation4], %s203
        %v205 = vld [vmem:[%s204] sm:$0x1]
        %p206 = scmp.lt.s32.totalorder %s201, 8
        %s207 = scalar_select %p206, 1, 0
        %v208 = vstv %s207
        %vm209 = vcmp.eq.s32.totalorder %v208, 1
        %v210 = vsel %vm209, %v205, 0.0
        %211 = vst.msk [vmem:[%s114 + $0x7] sm:$0x1] %vm126, %v210
        %s212 = sand.u32 %s52, 1
        %s213 = scalar_lea.sflag [#allocation6], %s212
        %s214 = sand.u32 %s52, 1
        %s215 = smul.addr %s214, 8
        %s216 = scalar_lea.vmem [#allocation7], %s215
        // Predicated region
        $region29: #{g_unpool.1} parent=23 // pred_check
          %p217 = pneg %p62
        $region30: #{g_unpool.1} parent=23 // pred_check_branch
          %219 = sbr.rel (%p217) target = $region32
        $region31: #{g_unpool.1} parent=23 // pred_region
          %s221 = ssub.s32 128, 128
          %222 = vsyncadd %s213, %s221
          %s223 = smul.addr %s23, 128
          %s224 = scalar_lea.hbm %s2, %s223
          %s226 = sshll.u32 %s216, 4
          %s227 = int_to_ptr.vmem [resolvable:$true] %s226
          %229 = dma.vmem_to_hbm [thread:$0]  %s227, 128, %s224, %s213
        $region32: #{g_unpool.1} parent=23 // pred_fallthru
          _
      $region24: #{g_unpool.1} parent=5 // pred_fallthru
        _
      %p230 = scmp.le.s32.totalorder 2, %s18
      // Predicated region
      $region33: #{g_unpool.1} parent=5 // pred_check
        %p231 = pneg %p230
      $region34: #{g_unpool.1} parent=5 // pred_check_branch
        %233 = sbr.rel (%p231) target = $region36
      $region35: #{g_unpool.1} parent=5 // pred_region
        %s234 = ssub.s32 %s18, 2
        // Predicated region
        $region37: #{g_unpool.1} parent=35 // pred_check
          %p235 = pneg %p68
        $region38: #{g_unpool.1} parent=35 // pred_check_branch
          %237 = sbr.rel (%p235) target = $region40
        $region39: #{g_unpool.1} parent=35 // pred_region
          %s238 = sand.u32 %s53, 1
          %s239 = scalar_lea.sflag [#allocation6], %s238
          %s240 = sand.u32 %s53, 1
          %s241 = smul.addr %s240, 8
          %s242 = scalar_lea.vmem [#allocation7], %s241
          %243 = dma.done %s239, 128
        $region40: #{g_unpool.1} parent=35 // pred_fallthru
          _
      $region36: #{g_unpool.1} parent=5 // pred_fallthru
        _
    $region6: #{g_unpool.1} parent=1 // loop_footer
      %s22 = sadd.s32 1, %s18
    $region7: #{g_unpool.1} parent=1 // loop_footer_branch
      %17 = sbr.rel target = $region3
    $region8: #{g_unpool.1} parent=1 // loop_exit
      _
    %244 = vsyncpa [#allocation5], 1
    %s245 = scalar_lea.sflag [#allocation5], 1
    %246 = vsyncpa %s245, 1
    %247 = vsyncpa [#allocation6], 1
    %s248 = scalar_lea.sflag [#allocation6], 1
    %249 = vsyncpa %s248, 1

</llo_original>
